<compile_context>
chip_gen: v6e
topology: v6e:2x2x1
jax: 0.10.0
libtpu: 0.0.40
codegen_flags: <defaults>
</compile_context>

<pallas_src>
import jax
import jax.numpy as jnp
from jax.experimental import pallas as pl
from jax.experimental.pallas import tpu as pltpu


_VMEM_BUDGET_CACHE = None


def _vmem_budget_bytes():
    """~75% of physical per-core VMEM (48 MiB on v7x, 96 MiB on v5e/v6e)."""
    global _VMEM_BUDGET_CACHE
    if _VMEM_BUDGET_CACHE is None:
        try:
            cap = int(pltpu.get_tpu_info().vmem_capacity_bytes)
        except Exception:
            cap = 64 << 20  # conservative (v7x-sized) fallback
        _VMEM_BUDGET_CACHE = (cap * 3) // 4
    return _VMEM_BUDGET_CACHE


def _select_tiles(M, D, V, vmem_budget):
    """Pick (tm, tn, weight_buffer_count) from static shapes + VMEM budget."""
    # Row tile: large for prefill, full-M for decode (x / out tiles then stay
    # resident across the whole weight stream). Multiple of 16 or == M.
    if M < 16:
        tm = M
    elif M < 512:
        tm = (M // 16) * 16
    else:
        tm = 512

    if V <= 128:
        return tm, V, 2

    def tile_bytes(tn, w_bufs):
        return (2 * tm * D * 2          # x tiles, bf16, double-buffered
                + w_bufs * D * tn * 2   # weight tiles, bf16
                + 2 * tm * tn * 4       # out tiles, f32, double-buffered
                + 2 * tn * 4)           # bias tiles

    tn_cap = min(2048, (V // 128) * 128)
    candidates = list(range(tn_cap, 127, -128))

    def best_tn(w_bufs):
        fitting = [c for c in candidates if tile_bytes(c, w_bufs) <= vmem_budget]
        if not fitting:
            return None
        top = fitting[0]
        # Mild preference for a tn that divides V (no ragged last vocab tile)
        # when it costs at most 256 lanes of tile width.
        for c in fitting:
            if c < top - 256:
                break
            if V % c == 0:
                return c
        return top

    tn_db = best_tn(2)   # double-buffered weights
    tn_sb = best_tn(1)   # single-buffered weights (v7x / VMEM-tight)
    inner_m_steps = -(-M // tm)
    if tn_db is not None and (tn_sb is None or tn_sb < 2 * tn_db
                              or inner_m_steps < 4):
        return tm, tn_db, 2
    if tn_sb is not None:
        return tm, tn_sb, 1
    return tm, 128, 1


def _lm_head_kernel(x_ref, w_ref, b_ref, o_ref):
    # x_ref: (tm, D) bf16   w_ref: (D, tn) bf16   b_ref: (1, tn) f32
    # o_ref: (tm, tn) f32
    acc = jnp.dot(x_ref[...], w_ref[...], preferred_element_type=jnp.float32)
    o_ref[...] = acc + b_ref[...]


@jax.jit
def lm_head_pallas(hidden, weight_bf16, bias_f32_2d):
    """hidden: (B, S, D); weight_bf16: (D, V) bf16; bias_f32_2d: (1, V) f32.

    Returns (B, S, V) float32 logits (matches `self.lm_head(h).float()`).
    """
    B, S, D = hidden.shape
    V = weight_bf16.shape[1]
    M = B * S

    vmem_budget = _vmem_budget_bytes()
    tm, tn, w_bufs = _select_tiles(M, D, V, vmem_budget)
    n_v = pl.cdiv(V, tn)
    n_m = pl.cdiv(M, tm)

    # Only the activations are cast per call (no-op if the backbone already
    # runs bf16); the DxV weight cast is hoisted to prepare_lm_head_params.
    x2d = hidden.reshape(M, D).astype(jnp.bfloat16)

    w_spec_kwargs = {}
    if w_bufs == 1:
        # Weight tile only changes once per outer V step; single-buffering it
        # saves VMEM (lets a larger tn fit on v7x) and the exposed DMA
        # amortizes over the n_m inner steps.
        w_spec_kwargs["pipeline_mode"] = pl.Buffered(1)

    tile_bytes = (2 * tm * D * 2 + w_bufs * D * tn * 2
                  + 2 * tm * tn * 4 + 2 * tn * 4)
    vmem_limit = int(min(vmem_budget, max(tile_bytes + (4 << 20), 32 << 20)))

    cost = pl.CostEstimate(
        flops=2 * (n_m * tm) * D * (n_v * tn),
        transcendentals=0,
        bytes_accessed=(n_v * M * D * 2   # activations re-read once per V tile
                        + D * V * 2       # weights streamed exactly once
                        + V * 4           # bias
                        + M * V * 4),     # f32 logits write
    )

    out = pl.pallas_call(
        _lm_head_kernel,
        out_shape=jax.ShapeDtypeStruct((M, V), jnp.float32),
        grid_spec=pltpu.PrefetchScalarGridSpec(
            num_scalar_prefetch=0,
            grid=(n_v, n_m),   # V outer (weight-resident), M inner (fast)
            in_specs=[
                # activations: depend only on the inner M index
                pl.BlockSpec((tm, D), lambda j, i: (i, 0)),
                # weight tile: depends only on the outer V index -> read from
                # HBM exactly once, resident across all inner M iterations
                pl.BlockSpec((D, tn), lambda j, i: (0, j), **w_spec_kwargs),
                # bias tile
                pl.BlockSpec((1, tn), lambda j, i: (0, j)),
            ],
            out_specs=pl.BlockSpec((tm, tn), lambda j, i: (i, j)),
        ),
        compiler_params=pltpu.CompilerParams(
            # V "parallel" / M "arbitrary": megacore (v7x) shards the vocab
            # axis, so the DxV weight is still read from HBM only once total.
            dimension_semantics=("parallel", "arbitrary"),
            vmem_limit_bytes=vmem_limit,
        ),
        cost_estimate=cost,
    )(x2d, weight_bf16, bias_f32_2d)

    return out.reshape(B, S, V)


def pad_vocab(vocab_size, pad_multiple):
    if vocab_size % pad_multiple != 0:
        vocab_size += pad_multiple - vocab_size % pad_multiple
    return vocab_size


def prepare_lm_head_params(weight_dv, bias_v):
    """One-time (checkpoint-load-time) prep: cast lm_head weight to bf16 and
    bias to f32 so the per-forward path does no DxV HBM cast/pad copies."""
    return {
        "lm_head_w": weight_dv.astype(jnp.bfloat16),               # (D, V)
        "lm_head_b": bias_v.astype(jnp.float32).reshape(1, -1),    # (1, V)
    }


def lm_head_model_forward(input_ids, params, *, num_last_tokens=0):
    """Mirrors LMHeadModel.forward (return_logits=True path)."""
    # TODO(synk): MixerModel backbone not available; embedding lookup stands
    # in as the producer of `last_hidden_state`.
    last_hidden_state = jnp.take(params["embed"], input_ids, axis=0)  # (B,S,D)

    # Project only the tokens we need: equivalent to slicing the logits
    # afterwards, but avoids computing/writing the full (B,S,V) f32 logits.
    hidden_for_logits = last_hidden_state
    if num_last_tokens > 0:
        hidden_for_logits = last_hidden_state[:, -num_last_tokens:]

    logits = lm_head_pallas(
        hidden_for_logits, params["lm_head_w"], params["lm_head_b"]
    )  # (B, S or num_last_tokens, V) float32
    # NOTE: columns [raw_vocab_size, V) are the module-level padded vocab
    # entries, exactly as in the padded nn.Linear; callers mask if needed.
    return {
        "loss": None,
        "logits": logits,
        "last_hidden_state": last_hidden_state,
    }


if __name__ == "__main__":
    # Small config consistent with the module's __init__.
    raw_vocab_size = 50
    pad_vocab_size_multiple = 16
    d_model = 32
    batch, seq = 2, 8

    vocab_size = pad_vocab(raw_vocab_size, pad_vocab_size_multiple)  # -> 64

    key = jax.random.PRNGKey(0)
    k_embed, k_w, k_b, k_ids = jax.random.split(key, 4)

    embed = jax.random.normal(k_embed, (vocab_size, d_model), jnp.float32) * 0.02
    # nn.Linear(d_model, vocab_size, bias=True); stored transposed as (D, V).
    lm_head_w = jax.random.normal(k_w, (d_model, vocab_size), jnp.float32) * 0.02
    lm_head_b = jax.random.normal(k_b, (vocab_size,), jnp.float32) * 0.02

    params = {"embed": embed}
    params.update(prepare_lm_head_params(lm_head_w, lm_head_b))

    input_ids = jax.random.randint(k_ids, (batch, seq), 0, raw_vocab_size, jnp.int32)

    out = lm_head_model_forward(input_ids, params, num_last_tokens=0)
    logits = jax.block_until_ready(out["logits"])

    # Reference check: same bf16-input / f32-accumulate math as the MXU path.
    # (At realistic d_model the bf16 path needs looser tolerances.)
    hidden = jnp.take(embed, input_ids, axis=0)
    h_bf = hidden.reshape(-1, d_model).astype(jnp.bfloat16).astype(jnp.float32)
    w_bf = lm_head_w.astype(jnp.bfloat16).astype(jnp.float32)
    ref = (h_bf @ w_bf + lm_head_b).reshape(
        batch, seq, vocab_size).astype(jnp.float32)
    assert logits.shape == (batch, seq, vocab_size)
    assert logits.dtype == jnp.float32
    assert jnp.allclose(logits, ref, atol=1e-4, rtol=1e-4)

    # Also exercise the num_last_tokens (decode) path.
    out_last = lm_head_model_forward(input_ids, params, num_last_tokens=1)
    logits_last = jax.block_until_ready(out_last["logits"])
    assert logits_last.shape == (batch, 1, vocab_size)
    assert jnp.allclose(logits_last, ref[:, -1:], atol=1e-4, rtol=1e-4)

    print("KERNEL_OK")
</pallas_src>

<mosaic_0001>
module attributes {stable_mosaic.version = 11 : i64} {
  func.func @_lm_head_kernel(%arg0: i32, %arg1: i32, %arg2: memref<16x32xbf16, #tpu.memory_space<vmem>>, %arg3: memref<32x64xbf16, #tpu.memory_space<vmem>>, %arg4: memref<1x64xf32, #tpu.memory_space<vmem>>, %arg5: memref<16x64xf32, #tpu.memory_space<vmem>>) attributes {dimension_semantics = [#tpu.dimension_semantics<parallel>, #tpu.dimension_semantics<arbitrary>], iteration_bounds = array<i64: 1, 1>, scalar_prefetch = 0 : i64, scratch_operands = 0 : i64, tpu.core_type = #tpu.core_type<tc>, window_params = [{transform_indices = @transform_0, window_bounds = array<i64: 16, 32>}, {transform_indices = @transform_1, window_bounds = array<i64: 32, 64>}, {transform_indices = @transform_2, window_bounds = array<i64: 1, 64>}, {transform_indices = @transform_3, window_bounds = array<i64: 16, 64>}]} {
    %c0 = arith.constant 0 : index
    %c0_0 = arith.constant 0 : index
    %0 = vector.load %arg2[%c0, %c0_0] : memref<16x32xbf16, #tpu.memory_space<vmem>>, vector<16x32xbf16>
    %c0_1 = arith.constant 0 : index
    %c0_2 = arith.constant 0 : index
    %1 = vector.load %arg3[%c0_1, %c0_2] : memref<32x64xbf16, #tpu.memory_space<vmem>>, vector<32x64xbf16>
    %cst = arith.constant dense<0.000000e+00> : vector<16x64xf32>
    %2 = tpu.matmul %0, %1, %cst {dimension_numbers = #tpu.dot_dimension_numbers<[1], [0], [0], [1], [0, 0, 1, 1], [], []>} : vector<16x32xbf16>, vector<32x64xbf16>, vector<16x64xf32> -> vector<16x64xf32>
    %c0_3 = arith.constant 0 : index
    %c0_4 = arith.constant 0 : index
    %3 = vector.load %arg4[%c0_3, %c0_4] : memref<1x64xf32, #tpu.memory_space<vmem>>, vector<1x64xf32>
    %4 = vector.broadcast %3 : vector<1x64xf32> to vector<16x64xf32>
    %5 = arith.addf %2, %4 : vector<16x64xf32>
    %c0_5 = arith.constant 0 : index
    %c0_6 = arith.constant 0 : index
    %6 = vector.load %arg5[%c0_5, %c0_6] : memref<16x64xf32, #tpu.memory_space<vmem>>, vector<16x64xf32>
    tpu.vector_store %arg5[%c0_5, %c0_6], %5 {strides = array<i32>} : memref<16x64xf32, #tpu.memory_space<vmem>>, vector<16x64xf32>,
    return
  }
  func.func @transform_0(%arg0: i32, %arg1: i32) -> (i32, i32) {
    %c0_i32 = arith.constant 0 : i32
    %c0_i32_0 = arith.constant 0 : i32
    return %arg1, %c0_i32 : i32, i32
  }
  func.func @transform_1(%arg0: i32, %arg1: i32) -> (i32, i32) {
    %c0_i32 = arith.constant 0 : i32
    %c0_i32_0 = arith.constant 0 : i32
    return %c0_i32, %arg0 : i32, i32
  }
  func.func @transform_2(%arg0: i32, %arg1: i32) -> (i32, i32) {
    %c0_i32 = arith.constant 0 : i32
    %c0_i32_0 = arith.constant 0 : i32
    return %c0_i32, %arg0 : i32, i32
  }
  func.func @transform_3(%arg0: i32, %arg1: i32) -> (i32, i32) {
    %c0_i32 = arith.constant 0 : i32
    return %arg1, %arg0 : i32, i32
  }
}

</mosaic_0001>

<llo_original>
// kernel: lm_head_pallas.1
$region0: #{lm_head_pallas.1}
  #allocation0 [shape = 'u32[]', space=smem, size = 0x4, offset = 0x4, fixed_abs, tag = 'smem constant byte address 0x4 - core index']
  #allocation1 [shape = 'u32[144,128]{1,0:T(1,128)}', space=vmem, size = 0x12000, scoped, tag = 'internal scratch']
  %s0 = inlined_call_operand.vmem [shape: bf16[16,32], index: 0, kind: input, shape index: {}]
  %s1 = inlined_call_operand.vmem [shape: bf16[32,64], index: 1, kind: input, shape index: {}]
  %s2 = inlined_call_operand.vmem [shape: f32[1,64], index: 2, kind: input, shape index: {}]
  %s3 = inlined_call_operand.hbm [shape: f32[16,64], index: 3, kind: output, shape index: {}]
  %s4 = sld [smem:[#allocation0]]
  $region22: #{lm_head_pallas.1} parent=0
    _
  %s6 = ssub.s32 1, %s4
  %s7 = scalar_select 0, %s6, %s4
  $region1: #{lm_head_pallas.1} parent=0
    #allocation2 [shape = 'u8[8192]{0}', space=vmem, size = 0x2000, scoped, tag = 'output window, operand 0, single buffered']
    #allocation3 [shape = 's32[1]{0}', space=sflag, size = 0x4, scoped, tag = 'scoped memory for lm_head_pallas.1']
    %8 = vsyncpa [#allocation3], 0
    // Predicated region
    $region2: #{lm_head_pallas.1} parent=1 // pred_check
      _
    $region3: #{lm_head_pallas.1} parent=1 // pred_check_branch
      %10 = sbr.rel (0) target = $region5
    $region4: #{lm_head_pallas.1} parent=1 // pred_region
      _
    $region5: #{lm_head_pallas.1} parent=1 // pred_fallthru
      _
    // Predicated region
    $region6: #{lm_head_pallas.1} parent=1 // pred_check
      _
    $region7: #{lm_head_pallas.1} parent=1 // pred_check_branch
      %12 = sbr.rel (0) target = $region9
    $region8: #{lm_head_pallas.1} parent=1 // pred_region
      _
    $region9: #{lm_head_pallas.1} parent=1 // pred_fallthru
      _
    // Predicated region
    $region10: #{lm_head_pallas.1} parent=1 // pred_check
      _
    $region11: #{lm_head_pallas.1} parent=1 // pred_check_branch
      %14 = sbr.rel (0) target = $region13
    $region12: #{lm_head_pallas.1} parent=1 // pred_region
      _
    $region13: #{lm_head_pallas.1} parent=1 // pred_fallthru
      _
    %v16 = vld [vmem:[%s0] sm:$0xf]
    %v17 = vld [vmem:[%s0 + $0x4] sm:$0xf]
    %v18 = vld [vmem:[%s1] sm:$0xf]
    %v19 = vld [vmem:[%s1 + $0x4] sm:$0xf]
    %v20 = vld [vmem:[%s1 + $0x8] sm:$0xf]
    %v21 = vld [vmem:[%s1 + $0xc] sm:$0xf]
    %v22 = vld [vmem:[%s2] sm:$0x1]
    %v24 = vlaneseq
    %v25 = vshrl.u32 %v24, 7
    %v26 = vsub.s32 0, %v25
    %v27 = vrot.slane %v22, %v26
    %v31 = vunpack.c.l.b16 %v16
    %v32 = vunpack.c.l.b16 %v17
    %v33 = vpack.c.b16 %v32, %v31
    %v38 = vunpack.c.l.b16 %v18
    %v39 = vunpack.c.l.b16 %v19
    %v40 = vunpack.c.l.b16 %v20
    %v41 = vunpack.c.l.b16 %v21
    %v42 = vpack.c.b16 %v39, %v38
    %v43 = vpack.c.b16 %v41, %v40
    %vm46 = vcmask 261120
    %v48 = vsel %vm46, %v33, 0
    %50 = vmatprep.subr.bf16.mxu0 0
    %51 = vmatpush1.bf16.msra.mxu0 0
    %52 = vmatprep.subr.bf16.mxu0 0
    %53 = vmatpush1.bf16.msra.mxu0 0
    %54 = vmatprep.subr.bf16.mxu0 0
    %55 = vmatpush1.bf16.msra.mxu0 0
    %56 = vmatprep.subr.bf16.mxu0 0
    %57 = vmatpush1.bf16.msra.mxu0 0
    %58 = vmatprep.subr.bf16.mxu0 0
    %59 = vmatpush1.bf16.msra.mxu0 0
    %60 = vmatprep.subr.bf16.mxu0 0
    %61 = vmatpush1.bf16.msra.mxu0 0
    %62 = vmatprep.subr.bf16.mxu0 0
    %63 = vmatpush1.bf16.msra.mxu0 %v43
    %64 = vmatprep.subr.bf16.mxu0 0
    %65 = vmatpush1.bf16.msra.mxu0 %v42
    %66 = vmatprep.subr.bf16.mxu0 0
    %67 = vmatpush2.bf16.msra.mxu0 0
    %68 = vmatprep.subr.bf16.mxu0 0
    %69 = vmatpush2.bf16.msra.mxu0 0
    %70 = vmatprep.subr.bf16.mxu0 0
    %71 = vmatpush2.bf16.msra.mxu0 0
    %72 = vmatprep.subr.bf16.mxu0 0
    %73 = vmatpush2.bf16.msra.mxu0 0
    %74 = vmatprep.subr.bf16.mxu0 0
    %75 = vmatpush2.bf16.msra.mxu0 0
    %76 = vmatprep.subr.bf16.mxu0 0
    %77 = vmatpush2.bf16.msra.mxu0 0
    %78 = vmatprep.subr.bf16.mxu0 0
    %79 = vmatpush2.bf16.msra.mxu0 0
    %80 = vmatprep.subr.bf16.mxu0 0
    %81 = vmatpush2.bf16.msra.mxu0 0
    %82 = vmatprep.mubr.bf16.mxu0 0
    %83 = vmatmul.mubr.bf16.gmra.mxu0 %v48
    %v84 = vpop.f32.mrf.mxu0
    %v85 = vadd.f32 %v27, %v84
    %v86 = vpop.f32.mrf.mxu0
    %v87 = vpop.f32.mrf.mxu0
    %v88 = vadd.f32 %v27, %v87
    %v89 = vpop.f32.mrf.mxu0
    %90 = vdwg.mxu0
    %vm91 = vcmask 523264
    %92 = vst.msk [vmem:[#allocation2] sm:$0xff] %vm91, %v85
    %93 = vst.msk [vmem:[#allocation2 + $0x8] sm:$0xff] %vm91, %v88
    // Predicated region
    $region14: #{lm_head_pallas.1} parent=1 // pred_check
      _
    $region15: #{lm_head_pallas.1} parent=1 // pred_check_branch
      %95 = sbr.rel (0) target = $region17
    $region16: #{lm_head_pallas.1} parent=1 // pred_region
      %s97 = ssub.s32 256, 256
      %98 = vsyncadd [#allocation3], %s97
      %s99 = sshll.u32 [#allocation2], 4
      %s100 = int_to_ptr.vmem [resolvable:$true] %s99
      %105 = dma.vmem_to_hbm [thread:$0]  %s100, 256, %s3, [#allocation3], 128, 128, 8
    $region17: #{lm_head_pallas.1} parent=1 // pred_fallthru
      _
    // Predicated region
    $region18: #{lm_head_pallas.1} parent=1 // pred_check
      _
    $region19: #{lm_head_pallas.1} parent=1 // pred_check_branch
      %107 = sbr.rel (0) target = $region21
    $region20: #{lm_head_pallas.1} parent=1 // pred_region
      %108 = dma.done [#allocation3], 256
    $region21: #{lm_head_pallas.1} parent=1 // pred_fallthru
      _
    %109 = vsyncpa [#allocation3], 1

</llo_original>
